<compile_context>
chip_gen: v6e
topology: v6e:2x2x1
jax: 0.10.0
libtpu: 0.0.40
codegen_flags: <defaults>
</compile_context>

<pallas_src>
import jax
import jax.numpy as jnp
from jax.experimental import pallas as pl
from jax.experimental.pallas import tpu as pltpu


# ----------------------------------------------------------------------------
# Kernel
# ----------------------------------------------------------------------------
def _residual_gelu_kernel(x_ref, o_ref):
    """o = fn(x) + x with fn = tanh-approx GELU, fused in-kernel.

    Math stays in the activation dtype (bf16 VPU/EUP exist on v6e/v7x; f32
    inputs stay f32; Mosaic auto-promotes on chips without bf16 units).
    """
    x = x_ref[...]
    # TODO(synk): PyTorch nn.GELU() defaults to the exact erf form; tanh-approx
    # differs at ~1e-3.  Kept per perf review (tanh -> EUP slot, free here).
    c = 0.7978845608028654  # sqrt(2/pi)
    fn_x = 0.5 * x * (1.0 + jnp.tanh(c * (x + 0.044715 * x * x * x)))
    o_ref[...] = (fn_x + x).astype(o_ref.dtype)


# ----------------------------------------------------------------------------
# Layout helpers
# ----------------------------------------------------------------------------
def _to_lane_dense_2d(x):
    """Flatten NCHW to (rows, cols), keeping cols a multiple of 128 if possible."""
    n, c, h, w = x.shape
    total = n * c * h * w
    if (h * w) % 128 == 0:
        rows, cols = n * c, h * w
    elif w % 128 == 0:
        rows, cols = n * c * h, w
    elif total % 128 == 0:
        cols = 128
        # Widen the lane dim while it still divides the total (cap at 4096).
        while total % (cols * 2) == 0 and cols * 2 <= 4096:
            cols *= 2
        rows = total // cols
    else:
        # No lane-dense factorisation: fall back to a single full-array block
        # (block dims equal to array dims are always legal).
        rows, cols = n * c, h * w
    return x.reshape(rows, cols), (n, c, h, w)


def _pick_block_rows(rows, cols, itemsize, vmem_tile_budget_bytes=4 << 20):
    """Largest row tile within a per-tile VMEM budget.

    Double-buffered in + out => ~4x tile bytes resident, so a 4 MiB tile stays
    well inside v7x's 32 MiB scoped / 64 MiB physical VMEM (and trivially on
    v5e/v6e with 128 MiB).
    """
    max_rows = max(1, vmem_tile_budget_bytes // (cols * itemsize))
    if rows <= max_rows:
        return rows                      # single block == full dim (legal)
    br = (max_rows // 8) * 8             # keep sublane alignment
    return max(8, min(br, 2048))


# ----------------------------------------------------------------------------
# Wrappers
# ----------------------------------------------------------------------------
def residual_fused(x_nchw):
    """Residual(GELU)(x) with fn fused into one Pallas kernel. x is NCHW."""
    x2d, shape = _to_lane_dense_2d(x_nchw)
    rows, cols = x2d.shape
    block_rows = _pick_block_rows(rows, cols, x2d.dtype.itemsize)
    grid_rows = pl.cdiv(rows, block_rows)

    out = pl.pallas_call(
        _residual_gelu_kernel,
        out_shape=jax.ShapeDtypeStruct((rows, cols), x_nchw.dtype),
        grid=(grid_rows,),
        in_specs=[pl.BlockSpec((block_rows, cols), lambda i: (i, 0))],
        out_specs=pl.BlockSpec((block_rows, cols), lambda i: (i, 0)),
        input_output_aliases={0: 0},
        compiler_params=pltpu.CompilerParams(
            dimension_semantics=("parallel",)),
    )(x2d)
    return out.reshape(shape)


def residual_add(fx, x):
    """Generic Residual: fn(x) + x where fn(x) came from arbitrary JAX code.

    Per perf review this is deliberately NOT a Pallas kernel: a standalone
    elementwise add at these sizes is launch-overhead bound and the custom-call
    boundary would prevent XLA from fusing the add into fn's producer.
    """
    return fx + x


# ----------------------------------------------------------------------------
# Main
# ----------------------------------------------------------------------------
if __name__ == "__main__":
    key = jax.random.PRNGKey(0)
    # NCHW, matching the PyTorch convention of the surrounding U-Net code.
    x = jax.random.normal(key, (2, 4, 16, 16), dtype=jnp.float32)

    # Reference: Residual(fn)(x) == fn(x) + x  (fn = tanh-GELU example).
    ref = jax.nn.gelu(x, approximate=True) + x

    # Fused path: fn = GELU computed inside the Pallas kernel.
    y_fused = residual_fused(x)
    jax.block_until_ready(y_fused)

    # Generic path: Residual around fn(x) computed in plain JAX (XLA fuses it).
    fx = jax.nn.gelu(x, approximate=True)
    y_generic = residual_add(fx, x)
    jax.block_until_ready(y_generic)

    assert jnp.allclose(y_fused, ref, atol=1e-5), "fused kernel mismatch"
    assert jnp.allclose(y_generic, ref, atol=1e-6), "generic path mismatch"

    print("KERNEL_OK")
</pallas_src>

<mosaic_0001>
module attributes {stable_mosaic.version = 11 : i64} {
  func.func @_residual_gelu_kernel(%arg0: i32, %arg1: memref<8x256xf32, #tpu.memory_space<vmem>>, %arg2: memref<8x256xf32, #tpu.memory_space<vmem>>) attributes {dimension_semantics = [#tpu.dimension_semantics<parallel>], iteration_bounds = array<i64: 1>, scalar_prefetch = 0 : i64, scratch_operands = 0 : i64, tpu.core_type = #tpu.core_type<tc>, window_params = [{transform_indices = @transform_0, window_bounds = array<i64: 8, 256>}, {transform_indices = @transform_1, window_bounds = array<i64: 8, 256>}]} {
    %c0 = arith.constant 0 : index
    %c0_0 = arith.constant 0 : index
    %0 = vector.load %arg1[%c0, %c0_0] : memref<8x256xf32, #tpu.memory_space<vmem>>, vector<8x256xf32>
    %cst = arith.constant 5.000000e-01 : f32
    %1 = vector.broadcast %cst : f32 to vector<8x256xf32>
    %2 = arith.mulf %1, %0 : vector<8x256xf32>
    %cst_1 = arith.constant 4.471500e-02 : f32
    %3 = vector.broadcast %cst_1 : f32 to vector<8x256xf32>
    %4 = arith.mulf %3, %0 : vector<8x256xf32>
    %5 = arith.mulf %4, %0 : vector<8x256xf32>
    %6 = arith.mulf %5, %0 : vector<8x256xf32>
    %7 = arith.addf %0, %6 : vector<8x256xf32>
    %cst_2 = arith.constant 0.797884583 : f32
    %8 = vector.broadcast %cst_2 : f32 to vector<8x256xf32>
    %9 = arith.mulf %8, %7 : vector<8x256xf32>
    %10 = math.tanh %9 : vector<8x256xf32>
    %cst_3 = arith.constant 1.000000e+00 : f32
    %11 = vector.broadcast %cst_3 : f32 to vector<8x256xf32>
    %12 = arith.addf %11, %10 : vector<8x256xf32>
    %13 = arith.mulf %2, %12 : vector<8x256xf32>
    %14 = arith.addf %13, %0 : vector<8x256xf32>
    %c0_4 = arith.constant 0 : index
    %c0_5 = arith.constant 0 : index
    %15 = vector.load %arg2[%c0_4, %c0_5] : memref<8x256xf32, #tpu.memory_space<vmem>>, vector<8x256xf32>
    tpu.vector_store %arg2[%c0_4, %c0_5], %14 {strides = array<i32>} : memref<8x256xf32, #tpu.memory_space<vmem>>, vector<8x256xf32>,
    return
  }
  func.func @transform_0(%arg0: i32) -> (i32, i32) {
    %c0_i32 = arith.constant 0 : i32
    %c0_i32_0 = arith.constant 0 : i32
    return %arg0, %c0_i32 : i32, i32
  }
  func.func @transform_1(%arg0: i32) -> (i32, i32) {
    %c0_i32 = arith.constant 0 : i32
    %c0_i32_0 = arith.constant 0 : i32
    return %arg0, %c0_i32 : i32, i32
  }
}

</mosaic_0001>

<llo_original>
// kernel: tpu_custom_call.1
$region0: #{tpu_custom_call.1}
  #allocation0 [shape = 'u32[]', space=smem, size = 0x4, offset = 0x4, fixed_abs, tag = 'smem constant byte address 0x4 - core index']
  #allocation1 [shape = 'u32[144,128]{1,0:T(1,128)}', space=vmem, size = 0x12000, scoped, tag = 'internal scratch']
  %s0 = inlined_call_operand.hbm [shape: f32[8,256], index: 0, kind: input, shape index: {}, may-alias: {0,1}]
  %s1 = inlined_call_operand.hbm [shape: f32[8,256], index: 1, kind: output, shape index: {}, may-alias: {0,1}]
  %s2 = sld [smem:[#allocation0]]
  $region18: #{tpu_custom_call.1} parent=0
    _
  %s4 = ssub.s32 1, %s2
  %s5 = scalar_select 0, %s4, %s2
  $region1: #{tpu_custom_call.1} parent=0
    #allocation2 [shape = 'u8[8192]{0}', space=vmem, size = 0x2000, scoped, tag = 'input window, operand 0, single buffered']
    #allocation3 [shape = 's32[1]{0}', space=sflag, size = 0x4, scoped, tag = 'scoped memory for tpu_custom_call.1']
    #allocation4 [shape = 's32[1]{0}', space=sflag, size = 0x4, scoped, tag = 'scoped memory for tpu_custom_call.1']
    #allocation5 [shape = 'u8[8192]{0}', space=vmem, size = 0x2000, scoped, tag = 'output window, operand 0, single buffered']
    %6 = vsyncpa [#allocation3], 0
    %7 = vsyncpa [#allocation4], 0
    // Predicated region
    $region2: #{tpu_custom_call.1} parent=1 // pred_check
      _
    $region3: #{tpu_custom_call.1} parent=1 // pred_check_branch
      %9 = sbr.rel (0) target = $region5
    $region4: #{tpu_custom_call.1} parent=1 // pred_region
      %s11 = ssub.s32 256, 256
      %12 = vsyncadd [#allocation3], %s11
      %s14 = sshll.u32 [#allocation2], 4
      %s15 = int_to_ptr.vmem [resolvable:$true] %s14
      %17 = dma.hbm_to_vmem [thread:$0]  %s0, 256, %s15, [#allocation3]
    $region5: #{tpu_custom_call.1} parent=1 // pred_fallthru
      _
    // Predicated region
    $region6: #{tpu_custom_call.1} parent=1 // pred_check
      _
    $region7: #{tpu_custom_call.1} parent=1 // pred_check_branch
      %19 = sbr.rel (0) target = $region9
    $region8: #{tpu_custom_call.1} parent=1 // pred_region
      %20 = dma.done [#allocation3], 256
    $region9: #{tpu_custom_call.1} parent=1 // pred_fallthru
      _
    %v21 = vld [vmem:[#allocation2] sm:$0xff]
    %v22 = vld [vmem:[#allocation2 + $0x8] sm:$0xff]
    %v23 = vmul.f32 %v21, 0.5
    %v24 = vmul.f32 %v22, 0.5
    %v25 = vmul.f32 %v21, 0.044715
    %v26 = vmul.f32 %v22, 0.044715
    %v27 = vmul.f32 %v25, %v21
    %v28 = vmul.f32 %v26, %v22
    %v29 = vmul.f32 %v27, %v21
    %v30 = vmul.f32 %v28, %v22
    %v31 = vadd.f32 %v21, %v29
    %v32 = vadd.f32 %v22, %v30
    %v33 = vmul.f32 %v31, 0.7978846
    %v34 = vmul.f32 %v32, 0.7978846
    %v35 = vtanh.pop %v33
    %v36 = vtanh.pop %v34
    %v37 = vadd.f32 %v35, 1.0
    %v38 = vadd.f32 %v36, 1.0
    %v39 = vmul.f32 %v23, %v37
    %v40 = vmul.f32 %v24, %v38
    %v41 = vadd.f32 %v39, %v21
    %v42 = vadd.f32 %v40, %v22
    %43 = vst [vmem:[#allocation5] sm:$0xff] %v41
    %44 = vst [vmem:[#allocation5 + $0x8] sm:$0xff] %v42
    // Predicated region
    $region10: #{tpu_custom_call.1} parent=1 // pred_check
      _
    $region11: #{tpu_custom_call.1} parent=1 // pred_check_branch
      %46 = sbr.rel (0) target = $region13
    $region12: #{tpu_custom_call.1} parent=1 // pred_region
      %s48 = ssub.s32 256, 256
      %49 = vsyncadd [#allocation4], %s48
      %s51 = sshll.u32 [#allocation5], 4
      %s52 = int_to_ptr.vmem [resolvable:$true] %s51
      %54 = dma.vmem_to_hbm [thread:$0]  %s52, 256, %s1, [#allocation4]
    $region13: #{tpu_custom_call.1} parent=1 // pred_fallthru
      _
    // Predicated region
    $region14: #{tpu_custom_call.1} parent=1 // pred_check
      _
    $region15: #{tpu_custom_call.1} parent=1 // pred_check_branch
      %56 = sbr.rel (0) target = $region17
    $region16: #{tpu_custom_call.1} parent=1 // pred_region
      %57 = dma.done [#allocation4], 256
    $region17: #{tpu_custom_call.1} parent=1 // pred_fallthru
      _
    %58 = vsyncpa [#allocation3], 1
    %59 = vsyncpa [#allocation4], 1

</llo_original>
